<compile_context>
chip_gen: v5e
topology: v5e:2x2
jax: 0.10.0
libtpu: 0.0.40
codegen_flags: <defaults>
</compile_context>

<pallas_src>
import functools

import jax
import jax.numpy as jnp
from jax.experimental import pallas as pl
from jax.experimental.pallas import tpu as pltpu

_LANE = 128
_MAX_TILE_N = 128 * 1024  # f32 elements per grid step (multiple of 1024)


def _round_up(x: int, m: int) -> int:
    return (x + m - 1) // m * m


def _angle_loss_kernel(inp_ref, tgt_ref, loss_ref, mag_ref, *, n, tile_n):
    # inp_ref:  (3, TR, 128)  rows = [fixation_logit, xy0, xy1]
    # tgt_ref:  (2, TR, 128)  rows = [fixation_target, angle_target]
    # loss_ref: (2, TR, 128)  rows = [fixation BCE, angle loss]
    # mag_ref:  (1, 8, 128)   per-tile partial sums of (|xy| - 1)^2 (padding masked)
    tr = inp_ref.shape[1]

    z = inp_ref[0]       # (TR, 128) fixation logit
    x = inp_ref[1]       # (TR, 128) arctan2 numerator
    y = inp_ref[2]       # (TR, 128) arctan2 denominator
    t_fix = tgt_ref[0]   # (TR, 128)
    t_ang = tgt_ref[1]   # (TR, 128)

    # angle loss: 1 - cos(atan2(x, y) - t)
    # cos(a - t) = cos(a)cos(t) + sin(a)sin(t), with cos(a) = y/r, sin(a) = x/r.
    r2 = x * x + y * y
    inv_r = jax.lax.rsqrt(jnp.maximum(r2, 1e-30))
    cos_t = jnp.cos(t_ang)
    sin_t = jnp.sin(t_ang)
    cos_diff = jnp.where(r2 > 0.0, (y * cos_t + x * sin_t) * inv_r, cos_t)  # atan2(0,0)=0
    loss_ref[1] = 1.0 - cos_diff

    # per-element binary cross entropy with logits (stable form, log1p)
    loss_ref[0] = jnp.maximum(z, 0.0) - z * t_fix + jnp.log1p(jnp.exp(-jnp.abs(z)))

    # magnitude regulariser partial: sum over this tile of (|xy| - 1)^2, padding masked.
    r = r2 * inv_r                       # == sqrt(r2) without an extra EUP sqrt
    mag_err = (r - 1.0) ** 2
    base = pl.program_id(0) * tile_n
    rows = jax.lax.broadcasted_iota(jnp.int32, (tr, _LANE), 0)
    lanes = jax.lax.broadcasted_iota(jnp.int32, (tr, _LANE), 1)
    valid = (base + rows * _LANE + lanes) < n
    masked = jnp.where(valid, mag_err, 0.0)
    # (TR, 128) -> (TR//8, 8, 128) is a layout-preserving split of the sublane axis.
    mag_ref[...] = jnp.sum(masked.reshape(tr // 8, 8, _LANE), axis=0, keepdims=True)


@functools.partial(jax.jit, static_argnames=("mag_w",))
def angle_loss(inp, tgt, mag_w: float = 0.01):
    """inp: (N, 3) float32, tgt: (N, 2) float32 -> (loss_grid (N, 2), mag_loss scalar)."""
    n = inp.shape[0]
    assert inp.shape == (n, 3) and tgt.shape == (n, 2)

    # Tile size: multiple of 1024 (so TR is a multiple of 8), capped for VMEM.
    tile_n = min(_MAX_TILE_N, _round_up(n, 1024))
    n_pad = _round_up(n, tile_n)
    num_tiles = n_pad // tile_n
    r_rows = n_pad // _LANE          # total rows of 128 lanes
    tr = tile_n // _LANE             # rows per tile (multiple of 8)

    # Feature-major, padded, lane-dense layout (fuses under jit).
    inp_t = jnp.pad(inp.T.astype(jnp.float32), ((0, 0), (0, n_pad - n)))
    tgt_t = jnp.pad(tgt.T.astype(jnp.float32), ((0, 0), (0, n_pad - n)))
    inp3 = inp_t.reshape(3, r_rows, _LANE)
    tgt3 = tgt_t.reshape(2, r_rows, _LANE)

    kernel = functools.partial(_angle_loss_kernel, n=n, tile_n=tile_n)

    loss3, mag_part = pl.pallas_call(
        kernel,
        out_shape=(
            jax.ShapeDtypeStruct((2, r_rows, _LANE), jnp.float32),
            jax.ShapeDtypeStruct((num_tiles, 8, _LANE), jnp.float32),
        ),
        grid=(num_tiles,),
        in_specs=[
            pl.BlockSpec((3, tr, _LANE), lambda i: (0, i, 0)),
            pl.BlockSpec((2, tr, _LANE), lambda i: (0, i, 0)),
        ],
        out_specs=(
            pl.BlockSpec((2, tr, _LANE), lambda i: (0, i, 0)),
            pl.BlockSpec((1, 8, _LANE), lambda i: (i, 0, 0)),
        ),
        compiler_params=pltpu.CompilerParams(
            dimension_semantics=("parallel",),
        ),
    )(inp3, tgt3)

    loss_grid = loss3.reshape(2, n_pad)[:, :n].T            # (N, 2)
    mag_loss = (mag_w / n) * jnp.sum(mag_part)               # true-N mean
    return loss_grid, mag_loss


def _reference_angle_loss(inp, tgt, mag_w=0.01):
    xy = inp[:, 1:]
    angles = jnp.arctan2(xy[:, 0], xy[:, 1])
    ang_loss = 1.0 - jnp.cos(angles - tgt[:, 1])
    mags = jnp.sqrt(xy[:, 0] ** 2 + xy[:, 1] ** 2)
    mag_loss = mag_w * jnp.mean((mags - 1.0) ** 2)
    z, t = inp[:, 0], tgt[:, 0]
    bce = jnp.maximum(z, 0.0) - z * t + jnp.log1p(jnp.exp(-jnp.abs(z)))
    return jnp.stack([bce, ang_loss], axis=1), mag_loss


def _run_check(n, key):
    k1, k2, k3 = jax.random.split(key, 3)
    inp = jax.random.normal(k1, (n, 3), dtype=jnp.float32)                   # (fix_logit, x, y)
    angle_target = jax.random.uniform(k2, (n,), minval=-3.0, maxval=3.0)
    fix_target = jax.random.bernoulli(k3, 0.5, (n,)).astype(jnp.float32)
    tgt = jnp.stack([fix_target, angle_target], axis=1).astype(jnp.float32)  # (N, 2)

    loss_grid, mag_loss = angle_loss(inp, tgt)
    jax.block_until_ready((loss_grid, mag_loss))

    ref_grid, ref_mag = _reference_angle_loss(inp, tgt)
    assert loss_grid.shape == (n, 2)
    assert jnp.allclose(loss_grid, ref_grid, atol=1e-5), f"loss_grid mismatch (N={n})"
    assert jnp.allclose(mag_loss, ref_mag, atol=1e-6), f"mag_loss mismatch (N={n})"


if __name__ == "__main__":
    key = jax.random.PRNGKey(0)
    k_small, k_mid = jax.random.split(key)
    _run_check(8, k_small)      # tiny case (heavy padding, single tile)
    _run_check(2000, k_mid)     # exercises non-trivial padding mask
    print("KERNEL_OK")
</pallas_src>

<mosaic_0001>
module attributes {stable_mosaic.version = 11 : i64} {
  func.func @_angle_loss_kernel(%arg0: i32, %arg1: memref<3x8x128xf32, #tpu.memory_space<vmem>>, %arg2: memref<2x8x128xf32, #tpu.memory_space<vmem>>, %arg3: memref<2x8x128xf32, #tpu.memory_space<vmem>>, %arg4: memref<1x8x128xf32, #tpu.memory_space<vmem>>) attributes {dimension_semantics = [#tpu.dimension_semantics<parallel>], iteration_bounds = array<i64: 1>, scalar_prefetch = 0 : i64, scratch_operands = 0 : i64, tpu.core_type = #tpu.core_type<tc>, window_params = [{transform_indices = @transform_0, window_bounds = array<i64: 3, 8, 128>}, {transform_indices = @transform_1, window_bounds = array<i64: 2, 8, 128>}, {transform_indices = @transform_2, window_bounds = array<i64: 2, 8, 128>}, {transform_indices = @transform_3, window_bounds = array<i64: 1, 8, 128>}]} {
    %c0 = arith.constant 0 : index
    %c0_0 = arith.constant 0 : index
    %c0_1 = arith.constant 0 : index
    %0 = vector.load %arg1[%c0, %c0_0, %c0_1] : memref<3x8x128xf32, #tpu.memory_space<vmem>>, vector<1x8x128xf32>
    %1 = vector.shape_cast %0 : vector<1x8x128xf32> to vector<8x128xf32>
    %c1 = arith.constant 1 : index
    %c0_2 = arith.constant 0 : index
    %c0_3 = arith.constant 0 : index
    %2 = vector.load %arg1[%c1, %c0_2, %c0_3] : memref<3x8x128xf32, #tpu.memory_space<vmem>>, vector<1x8x128xf32>
    %3 = vector.shape_cast %2 : vector<1x8x128xf32> to vector<8x128xf32>
    %c2 = arith.constant 2 : index
    %c0_4 = arith.constant 0 : index
    %c0_5 = arith.constant 0 : index
    %4 = vector.load %arg1[%c2, %c0_4, %c0_5] : memref<3x8x128xf32, #tpu.memory_space<vmem>>, vector<1x8x128xf32>
    %5 = vector.shape_cast %4 : vector<1x8x128xf32> to vector<8x128xf32>
    %c0_6 = arith.constant 0 : index
    %c0_7 = arith.constant 0 : index
    %c0_8 = arith.constant 0 : index
    %6 = vector.load %arg2[%c0_6, %c0_7, %c0_8] : memref<2x8x128xf32, #tpu.memory_space<vmem>>, vector<1x8x128xf32>
    %7 = vector.shape_cast %6 : vector<1x8x128xf32> to vector<8x128xf32>
    %c1_9 = arith.constant 1 : index
    %c0_10 = arith.constant 0 : index
    %c0_11 = arith.constant 0 : index
    %8 = vector.load %arg2[%c1_9, %c0_10, %c0_11] : memref<2x8x128xf32, #tpu.memory_space<vmem>>, vector<1x8x128xf32>
    %9 = vector.shape_cast %8 : vector<1x8x128xf32> to vector<8x128xf32>
    %10 = arith.mulf %3, %3 : vector<8x128xf32>
    %11 = arith.mulf %5, %5 : vector<8x128xf32>
    %12 = arith.addf %10, %11 : vector<8x128xf32>
    %cst = arith.constant 1.000000e-30 : f32
    %13 = vector.broadcast %cst : f32 to vector<8x128xf32>
    %14 = arith.maximumf %12, %13 : vector<8x128xf32>
    %15 = math.rsqrt %14 : vector<8x128xf32>
    %16 = math.cos %9 : vector<8x128xf32>
    %17 = math.sin %9 : vector<8x128xf32>
    %cst_12 = arith.constant 0.000000e+00 : f32
    %18 = vector.broadcast %cst_12 : f32 to vector<8x128xf32>
    %19 = arith.cmpf ogt, %12, %18 : vector<8x128xf32>
    %20 = arith.mulf %5, %16 : vector<8x128xf32>
    %21 = arith.mulf %3, %17 : vector<8x128xf32>
    %22 = arith.addf %20, %21 : vector<8x128xf32>
    %23 = arith.mulf %22, %15 : vector<8x128xf32>
    %24 = arith.select %19, %23, %16 : vector<8x128xi1>, vector<8x128xf32>
    %cst_13 = arith.constant 1.000000e+00 : f32
    %25 = vector.broadcast %cst_13 : f32 to vector<8x128xf32>
    %26 = arith.subf %25, %24 : vector<8x128xf32>
    %c1_14 = arith.constant 1 : index
    %c0_15 = arith.constant 0 : index
    %c0_16 = arith.constant 0 : index
    %27 = vector.load %arg3[%c1_14, %c0_15, %c0_16] : memref<2x8x128xf32, #tpu.memory_space<vmem>>, vector<1x8x128xf32>
    %28 = vector.shape_cast %27 : vector<1x8x128xf32> to vector<8x128xf32>
    %29 = vector.shape_cast %26 : vector<8x128xf32> to vector<1x8x128xf32>
    tpu.vector_store %arg3[%c1_14, %c0_15, %c0_16], %29 {strides = array<i32>} : memref<2x8x128xf32, #tpu.memory_space<vmem>>, vector<1x8x128xf32>,
    %cst_17 = arith.constant 0.000000e+00 : f32
    %30 = vector.broadcast %cst_17 : f32 to vector<8x128xf32>
    %31 = arith.maximumf %1, %30 : vector<8x128xf32>
    %32 = arith.mulf %1, %7 : vector<8x128xf32>
    %33 = arith.subf %31, %32 : vector<8x128xf32>
    %34 = math.absf %1 : vector<8x128xf32>
    %cst_18 = arith.constant 0.000000e+00 : f32
    %35 = vector.broadcast %cst_18 : f32 to vector<8x128xf32>
    %36 = arith.subf %35, %34 : vector<8x128xf32>
    %37 = math.exp %36 : vector<8x128xf32>
    %38 = math.log1p %37 : vector<8x128xf32>
    %39 = arith.addf %33, %38 : vector<8x128xf32>
    %c0_19 = arith.constant 0 : index
    %c0_20 = arith.constant 0 : index
    %c0_21 = arith.constant 0 : index
    %40 = vector.load %arg3[%c0_19, %c0_20, %c0_21] : memref<2x8x128xf32, #tpu.memory_space<vmem>>, vector<1x8x128xf32>
    %41 = vector.shape_cast %40 : vector<1x8x128xf32> to vector<8x128xf32>
    %42 = vector.shape_cast %39 : vector<8x128xf32> to vector<1x8x128xf32>
    tpu.vector_store %arg3[%c0_19, %c0_20, %c0_21], %42 {strides = array<i32>} : memref<2x8x128xf32, #tpu.memory_space<vmem>>, vector<1x8x128xf32>,
    %43 = arith.mulf %12, %15 : vector<8x128xf32>
    %cst_22 = arith.constant 1.000000e+00 : f32
    %44 = vector.broadcast %cst_22 : f32 to vector<8x128xf32>
    %45 = arith.subf %43, %44 : vector<8x128xf32>
    %46 = arith.mulf %45, %45 : vector<8x128xf32>
    %c1024_i32 = arith.constant 1024 : i32
    %47 = arith.muli %arg0, %c1024_i32 : i32
    %48 = tpu.iota {dimensions = array<i32: 0>} : vector<8x128xi32>
    %49 = tpu.iota {dimensions = array<i32: 1>} : vector<8x128xi32>
    %c128_i32 = arith.constant 128 : i32
    %50 = vector.broadcast %c128_i32 : i32 to vector<8x128xi32>
    %51 = arith.muli %48, %50 : vector<8x128xi32>
    %52 = vector.broadcast %47 : i32 to vector<8x128xi32>
    %53 = arith.addi %52, %51 : vector<8x128xi32>
    %54 = arith.addi %53, %49 : vector<8x128xi32>
    %c8_i32 = arith.constant 8 : i32
    %55 = vector.broadcast %c8_i32 : i32 to vector<8x128xi32>
    %56 = arith.cmpi slt, %54, %55 : vector<8x128xi32>
    %cst_23 = arith.constant 0.000000e+00 : f32
    %57 = vector.broadcast %cst_23 : f32 to vector<8x128xf32>
    %58 = arith.select %56, %46, %57 : vector<8x128xi1>, vector<8x128xf32>
    %59 = vector.shape_cast %58 : vector<8x128xf32> to vector<1x8x128xf32>
    %cst_24 = arith.constant dense<0.000000e+00> : vector<8x128xf32>
    %60 = vector.multi_reduction <add>, %59, %cst_24 [0] : vector<1x8x128xf32> to vector<8x128xf32>
    %61 = vector.shape_cast %60 : vector<8x128xf32> to vector<1x8x128xf32>
    %c0_25 = arith.constant 0 : index
    %c0_26 = arith.constant 0 : index
    %c0_27 = arith.constant 0 : index
    %62 = vector.load %arg4[%c0_25, %c0_26, %c0_27] : memref<1x8x128xf32, #tpu.memory_space<vmem>>, vector<1x8x128xf32>
    tpu.vector_store %arg4[%c0_25, %c0_26, %c0_27], %61 {strides = array<i32>} : memref<1x8x128xf32, #tpu.memory_space<vmem>>, vector<1x8x128xf32>,
    return
  }
  func.func @transform_0(%arg0: i32) -> (i32, i32, i32) {
    %c0_i32 = arith.constant 0 : i32
    %c0_i32_0 = arith.constant 0 : i32
    %c0_i32_1 = arith.constant 0 : i32
    return %c0_i32, %arg0, %c0_i32_0 : i32, i32, i32
  }
  func.func @transform_1(%arg0: i32) -> (i32, i32, i32) {
    %c0_i32 = arith.constant 0 : i32
    %c0_i32_0 = arith.constant 0 : i32
    %c0_i32_1 = arith.constant 0 : i32
    return %c0_i32, %arg0, %c0_i32_0 : i32, i32, i32
  }
  func.func @transform_2(%arg0: i32) -> (i32, i32, i32) {
    %c0_i32 = arith.constant 0 : i32
    %c0_i32_0 = arith.constant 0 : i32
    %c0_i32_1 = arith.constant 0 : i32
    return %c0_i32, %arg0, %c0_i32_0 : i32, i32, i32
  }
  func.func @transform_3(%arg0: i32) -> (i32, i32, i32) {
    %c0_i32 = arith.constant 0 : i32
    %c0_i32_0 = arith.constant 0 : i32
    %c0_i32_1 = arith.constant 0 : i32
    return %arg0, %c0_i32, %c0_i32_0 : i32, i32, i32
  }
}

</mosaic_0001>

<llo_original>
// kernel: angle_loss.1
$region0: #{angle_loss.1}
  #allocation0 [shape = 'u32[]', space=smem, size = 0x4, offset = 0x4, fixed_abs, tag = 'smem constant byte address 0x4 - core index']
  #allocation1 [shape = 'u32[72,128]{1,0:T(1,128)}', space=vmem, size = 0x9000, scoped, tag = 'internal scratch']
  %s0 = inlined_call_operand.vmem [shape: f32[3,8,128], index: 0, kind: input, shape index: {}]
  %s1 = inlined_call_operand.vmem [shape: f32[2,8,128], index: 1, kind: input, shape index: {}]
  %s2 = inlined_call_operand.vmem [shape: f32[2,8,128], index: 2, kind: output, shape index: {0}]
  %s3 = inlined_call_operand.vmem [shape: f32[1,8,128], index: 3, kind: output, shape index: {1}]
  %4 = xla_tuple %s2, %s3
  %s5 = sld [smem:[#allocation0]]
  $region26: #{angle_loss.1} parent=0
    _
  %s7 = ssub.s32 1, %s5
  %s8 = scalar_select 0, %s7, %s5
  // Predicated region
  $region2: #{angle_loss.1} parent=0 // pred_check
    _
  $region3: #{angle_loss.1} parent=0 // pred_check_branch
    %10 = sbr.rel (0) target = $region5
  $region4: #{angle_loss.1} parent=0 // pred_region
    _
  $region5: #{angle_loss.1} parent=0 // pred_fallthru
    _
  // Predicated region
  $region6: #{angle_loss.1} parent=0 // pred_check
    _
  $region7: #{angle_loss.1} parent=0 // pred_check_branch
    %12 = sbr.rel (0) target = $region9
  $region8: #{angle_loss.1} parent=0 // pred_region
    _
  $region9: #{angle_loss.1} parent=0 // pred_fallthru
    _
  %v13 = vld [vmem:[%s0] sm:$0xff]
  %s14 = scalar_lea.vmem %s0, 8
  %v15 = vld [vmem:[%s14] sm:$0xff]
  %s16 = scalar_lea.vmem %s0, 16
  %v17 = vld [vmem:[%s16] sm:$0xff]
  %v18 = vld [vmem:[%s1] sm:$0xff]
  %s19 = scalar_lea.vmem %s1, 8
  %v20 = vld [vmem:[%s19] sm:$0xff]
  %v21 = vmul.f32 %v15, %v15
  %v22 = vmul.f32 %v17, %v17
  %v23 = vadd.f32 %v21, %v22
  %v24 = vmax.f32 %v23, 1e-30
  %v25 = vrsqrt.pop %v24
  %v26 = vmul.f32 %v25, %v24
  %v27 = vmul.f32 %v26, %v25
  %v28 = vmul.f32 0.5, %v27
  %v29 = vsub.f32 1.5, %v28
  %v30 = vmul.f32 %v25, %v29
  %vm31 = vweird.f32 %v24
  %vm32 = vweird.f32 %v25
  %vm33 = vmor %vm31, %vm32
  %v34 = vsel %vm33, %v25, %v30
  %v35 = vand.u32 2147483647, %v20
  %vm36 = vcmp.le.f32.partialorder %v35, 0.7853982
  %vm37 = vcmp.lt.s32.totalorder %v20, 0
  %v38 = vand.u32 %v20, 2139095040
  %v39 = vshrl.u32 %v38, 23
  %v40 = vsub.s32 %v39, 127
  %v41 = vand.u32 2147483647, %v20
  %v42 = vand.u32 %v41, 8388607
  %v43 = vor.u32 %v42, 8388608
  %v44 = vsub.s32 0, %v43
  %v45 = vadd.s32 %v40, 1
  %vm46 = vcmp.gt.s32.totalorder %v45, 0
  %v47 = vsel %vm46, %v45, 0
  %v48 = vshrl.u32 %v47, 5
  %v49 = vand.u32 %v47, 31
  %v50 = vsub.s32 32, %v49
  %v51 = vshrl.u32 683565275, %v50
  %v52 = vshll.u32 683565275, %v49
  %v53 = vshrl.u32 2475754826, %v50
  %v54 = vor.u32 %v52, %v53
  %v55 = vshll.u32 2475754826, %v49
  %v56 = vshrl.u32 2131351028, %v50
  %v57 = vor.u32 %v55, %v56
  %v58 = vshll.u32 2131351028, %v49
  %v59 = vshrl.u32 2102212464, %v50
  %v60 = vor.u32 %v58, %v59
  %v61 = vshll.u32 2102212464, %v49
  %v62 = vshrl.u32 920167782, %v50
  %v63 = vor.u32 %v61, %v62
  %v64 = vshll.u32 920167782, %v49
  %v65 = vshrl.u32 1326507024, %v50
  %v66 = vor.u32 %v64, %v65
  %vm67 = vcmp.lt.s32.totalorder %v48, 1
  %vm68 = vcmp.lt.s32.totalorder %v48, 2
  %vm69 = vcmp.lt.s32.totalorder %v48, 3
  %vm70 = vcmp.lt.s32.totalorder %v48, 4
  %v71 = vsel %vm67, %v51, %v54
  %v72 = vsel %vm70, %v60, 2102212464
  %v73 = vsel %vm69, %v57, %v72
  %v74 = vsel %vm68, %v71, %v73
  %v75 = vsel %vm67, %v54, %v57
  %v76 = vsel %vm70, %v63, 920167782
  %v77 = vsel %vm69, %v60, %v76
  %v78 = vsel %vm68, %v75, %v77
  %v79 = vsel %vm67, %v57, %v60
  %v80 = vsel %vm70, %v66, 1326507024
  %v81 = vsel %vm69, %v63, %v80
  %v82 = vsel %vm68, %v79, %v81
  %v83 = vshll.u32 %v43, 8
  %v84 = vand.u32 %v83, 65535
  %v85 = vshrl.u32 %v83, 16
  %v86 = vand.u32 %v82, 65535
  %v87 = vshrl.u32 %v82, 16
  %v88 = vmul.u32 %v84, %v86
  %v89 = vmul.u32 %v84, %v87
  %v90 = vmul.u32 %v85, %v86
  %v91 = vmul.u32 %v85, %v87
  %v92 = vshll.u32 %v89, 16
  %v93 = vshrl.u32 %v89, 16
  %v94 = vshll.u32 %v90, 16
  %v95 = vshrl.u32 %v90, 16
  %vm96 = vc.u32 %v88, %v92
  %v97 = vsel %vm96, 1, 0
  %v98 = vadd.s32 %v88, %v92
  %v99 = vadd.s32 %v91, %v97
  %vm100 = vc.u32 %v98, %v94
  %v101 = vsel %vm100, 1, 0
  %v102 = vadd.s32 %v98, %v94
  %v103 = vadd.s32 %v99, %v101
  %v104 = vadd.s32 %v103, %v93
  %v105 = vadd.s32 %v104, %v95
  %v106 = vand.u32 %v83, 65535
  %v107 = vshrl.u32 %v83, 16
  %v108 = vand.u32 %v78, 65535
  %v109 = vshrl.u32 %v78, 16
  %v110 = vmul.u32 %v106, %v108
  %v111 = vmul.u32 %v106, %v109
  %v112 = vmul.u32 %v107, %v108
  %v113 = vmul.u32 %v107, %v109
  %v114 = vshll.u32 %v111, 16
  %v115 = vshrl.u32 %v111, 16
  %v116 = vshll.u32 %v112, 16
  %v117 = vshrl.u32 %v112, 16
  %vm118 = vc.u32 %v110, %v114
  %v119 = vsel %vm118, 1, 0
  %v120 = vadd.s32 %v110, %v114
  %v121 = vadd.s32 %v113, %v119
  %vm122 = vc.u32 %v120, %v116
  %v123 = vsel %vm122, 1, 0
  %v124 = vadd.s32 %v120, %v116
  %v125 = vadd.s32 %v121, %v123
  %v126 = vadd.s32 %v125, %v115
  %v127 = vadd.s32 %v126, %v117
  %v128 = vmul.u32 %v83, %v74
  %v129 = vadd.s32 %v105, %v124
  %vm130 = vc.u32 %v105, %v124
  %v131 = vadd.s32 %v127, 1
  %v132 = vsel %vm130, %v131, %v127
  %v133 = vadd.s32 %v128, %v132
  %v134 = vadd.s32 %v133, 536870912
  %v135 = vshrl.u32 %v134, 30
  %v136 = vshll.u32 %v135, 30
  %v137 = vsub.s32 %v133, %v136
  %vm138 = vcmp.lt.s32.totalorder %v137, 0
  %v139 = vsub.s32 0, %v137
  %v140 = vsel %vm138, %v139, %v137
  %v141 = vclz %v140
  %v142 = vsub.s32 %v141, 2
  %vm143 = vcmp.gt.s32.totalorder 0, %v142
  %v144 = vsel %vm143, 0, %v142
  %v145 = vsub.s32 32, %v144
  %v146 = vshll.u32 %v137, %v144
  %v147 = vshrl.u32 %v129, %v145
  %v148 = vor.u32 %v146, %v147
  %v149 = vsub.s32 4294967266, %v144
  %v150 = vadd.s32 %v149, 127
  %v151 = vshll.u32 %v150, 23
  %v152 = vor.u32 4788187, %v151
  %v153 = vand.u32 2147483647, %v152
  %v155 = vcvt.s32.f32 %v148
  %v156 = vmul.f32 %v155, %v153
  %v157 = vxor.u32 %v156, 2147483648
  %v158 = vsel %vm37, %v157, %v156
  %v159 = vsub.s32 4, %v135
  %v160 = vsel %vm37, %v159, %v135
  %v161 = vsel %vm36, %v20, %v158
  %v162 = vsel %vm36, 0, %v160
  %v163 = vmul.f32 %v161, %v161
  %v164 = vmul.f32 %v163, -0.001358992
  %v165 = vadd.f32 %v164, 0.041655596
  %v166 = vmul.f32 %v163, %v165
  %v167 = vadd.f32 %v166, -0.4999988
  %v168 = vmul.f32 %v163, %v167
  %v169 = vadd.f32 1.0, %v168
  %v170 = vmul.f32 %v161, %v161
  %v171 = vmul.f32 %v170, -0.00019511016
  %v172 = vadd.f32 %v171, 0.008332121
  %v173 = vmul.f32 %v170, %v172
  %v174 = vadd.f32 %v173, -0.16666654
  %v175 = vmul.f32 %v170, %v174
  %v176 = vadd.f32 %v175, 1.0
  %v177 = vmul.f32 %v176, %v161
  %vm178 = vweird.f32 %v20
  %v179 = vand.u32 %v162, 3
  %vm180 = vcmp.lt.s32.totalorder %v179, 2
  %vm181 = vcmp.eq.s32.totalorder %v179, 0
  %v182 = vxor.u32 %v177, 2147483648
  %v183 = vsel %vm181, %v169, %v182
  %vm184 = vcmp.eq.s32.totalorder %v179, 2
  %v185 = vxor.u32 %v169, 2147483648
  %v186 = vsel %vm184, %v185, %v177
  %v187 = vsel %vm180, %v183, %v186
  %v188 = vsel %vm178, nan, %v187
  %v189 = vand.u32 2147483647, %v20
  %vm190 = vcmp.le.f32.partialorder %v189, 0.7853982
  %vm191 = vcmp.lt.s32.totalorder %v20, 0
  %v192 = vand.u32 %v20, 2139095040
  %v193 = vshrl.u32 %v192, 23
  %v194 = vsub.s32 %v193, 127
  %v195 = vand.u32 2147483647, %v20
  %v196 = vand.u32 %v195, 8388607
  %v197 = vor.u32 %v196, 8388608
  %v198 = vsub.s32 0, %v197
  %v199 = vadd.s32 %v194, 1
  %vm200 = vcmp.gt.s32.totalorder %v199, 0
  %v201 = vsel %vm200, %v199, 0
  %v202 = vshrl.u32 %v201, 5
  %v203 = vand.u32 %v201, 31
  %v204 = vsub.s32 32, %v203
  %v205 = vshrl.u32 683565275, %v204
  %v206 = vshll.u32 683565275, %v203
  %v207 = vshrl.u32 2475754826, %v204
  %v208 = vor.u32 %v206, %v207
  %v209 = vshll.u32 2475754826, %v203
  %v210 = vshrl.u32 2131351028, %v204
  %v211 = vor.u32 %v209, %v210
  %v212 = vshll.u32 2131351028, %v203
  %v213 = vshrl.u32 2102212464, %v204
  %v214 = vor.u32 %v212, %v213
  %v215 = vshll.u32 2102212464, %v203
  %v216 = vshrl.u32 920167782, %v204
  %v217 = vor.u32 %v215, %v216
  %v218 = vshll.u32 920167782, %v203
  %v219 = vshrl.u32 1326507024, %v204
  %v220 = vor.u32 %v218, %v219
  %vm221 = vcmp.lt.s32.totalorder %v202, 1
  %vm222 = vcmp.lt.s32.totalorder %v202, 2
  %vm223 = vcmp.lt.s32.totalorder %v202, 3
  %vm224 = vcmp.lt.s32.totalorder %v202, 4
  %v225 = vsel %vm221, %v205, %v208
  %v226 = vsel %vm224, %v214, 2102212464
  %v227 = vsel %vm223, %v211, %v226
  %v228 = vsel %vm222, %v225, %v227
  %v229 = vsel %vm221, %v208, %v211
  %v230 = vsel %vm224, %v217, 920167782
  %v231 = vsel %vm223, %v214, %v230
  %v232 = vsel %vm222, %v229, %v231
  %v233 = vsel %vm221, %v211, %v214
  %v234 = vsel %vm224, %v220, 1326507024
  %v235 = vsel %vm223, %v217, %v234
  %v236 = vsel %vm222, %v233, %v235
  %v237 = vshll.u32 %v197, 8
  %v238 = vand.u32 %v237, 65535
  %v239 = vshrl.u32 %v237, 16
  %v240 = vand.u32 %v236, 65535
  %v241 = vshrl.u32 %v236, 16
  %v242 = vmul.u32 %v238, %v240
  %v243 = vmul.u32 %v238, %v241
  %v244 = vmul.u32 %v239, %v240
  %v245 = vmul.u32 %v239, %v241
  %v246 = vshll.u32 %v243, 16
  %v247 = vshrl.u32 %v243, 16
  %v248 = vshll.u32 %v244, 16
  %v249 = vshrl.u32 %v244, 16
  %vm250 = vc.u32 %v242, %v246
  %v251 = vsel %vm250, 1, 0
  %v252 = vadd.s32 %v242, %v246
  %v253 = vadd.s32 %v245, %v251
  %vm254 = vc.u32 %v252, %v248
  %v255 = vsel %vm254, 1, 0
  %v256 = vadd.s32 %v252, %v248
  %v257 = vadd.s32 %v253, %v255
  %v258 = vadd.s32 %v257, %v247
  %v259 = vadd.s32 %v258, %v249
  %v260 = vand.u32 %v237, 65535
  %v261 = vshrl.u32 %v237, 16
  %v262 = vand.u32 %v232, 65535
  %v263 = vshrl.u32 %v232, 16
  %v264 = vmul.u32 %v260, %v262
  %v265 = vmul.u32 %v260, %v263
  %v266 = vmul.u32 %v261, %v262
  %v267 = vmul.u32 %v261, %v263
  %v268 = vshll.u32 %v265, 16
  %v269 = vshrl.u32 %v265, 16
  %v270 = vshll.u32 %v266, 16
  %v271 = vshrl.u32 %v266, 16
  %vm272 = vc.u32 %v264, %v268
  %v273 = vsel %vm272, 1, 0
  %v274 = vadd.s32 %v264, %v268
  %v275 = vadd.s32 %v267, %v273
  %vm276 = vc.u32 %v274, %v270
  %v277 = vsel %vm276, 1, 0
  %v278 = vadd.s32 %v274, %v270
  %v279 = vadd.s32 %v275, %v277
  %v280 = vadd.s32 %v279, %v269
  %v281 = vadd.s32 %v280, %v271
  %v282 = vmul.u32 %v237, %v228
  %v283 = vadd.s32 %v259, %v278
  %vm284 = vc.u32 %v259, %v278
  %v285 = vadd.s32 %v281, 1
  %v286 = vsel %vm284, %v285, %v281
  %v287 = vadd.s32 %v282, %v286
  %v288 = vadd.s32 %v287, 536870912
  %v289 = vshrl.u32 %v288, 30
  %v290 = vshll.u32 %v289, 30
  %v291 = vsub.s32 %v287, %v290
  %vm292 = vcmp.lt.s32.totalorder %v291, 0
  %v293 = vsub.s32 0, %v291
  %v294 = vsel %vm292, %v293, %v291
  %v295 = vclz %v294
  %v296 = vsub.s32 %v295, 2
  %vm297 = vcmp.gt.s32.totalorder 0, %v296
  %v298 = vsel %vm297, 0, %v296
  %v299 = vsub.s32 32, %v298
  %v300 = vshll.u32 %v291, %v298
  %v301 = vshrl.u32 %v283, %v299
  %v302 = vor.u32 %v300, %v301
  %v303 = vsub.s32 4294967266, %v298
  %v304 = vadd.s32 %v303, 127
  %v305 = vshll.u32 %v304, 23
  %v306 = vor.u32 4788187, %v305
  %v307 = vand.u32 2147483647, %v306
  %v309 = vcvt.s32.f32 %v302
  %v310 = vmul.f32 %v309, %v307
  %v311 = vxor.u32 %v310, 2147483648
  %v312 = vsel %vm191, %v311, %v310
  %v313 = vsub.s32 4, %v289
  %v314 = vsel %vm191, %v313, %v289
  %v315 = vsel %vm190, %v20, %v312
  %v316 = vsel %vm190, 0, %v314
  %v317 = vmul.f32 %v315, %v315
  %v318 = vmul.f32 %v317, -0.001358992
  %v319 = vadd.f32 %v318, 0.041655596
  %v320 = vmul.f32 %v317, %v319
  %v321 = vadd.f32 %v320, -0.4999988
  %v322 = vmul.f32 %v317, %v321
  %v323 = vadd.f32 1.0, %v322
  %v324 = vmul.f32 %v315, %v315
  %v325 = vmul.f32 %v324, -0.00019511016
  %v326 = vadd.f32 %v325, 0.008332121
  %v327 = vmul.f32 %v324, %v326
  %v328 = vadd.f32 %v327, -0.16666654
  %v329 = vmul.f32 %v324, %v328
  %v330 = vadd.f32 %v329, 1.0
  %v331 = vmul.f32 %v330, %v315
  %vm332 = vweird.f32 %v20
  %v333 = vadd.s32 %v316, 3
  %v334 = vand.u32 %v333, 3
  %vm335 = vcmp.lt.s32.totalorder %v334, 2
  %vm336 = vcmp.eq.s32.totalorder %v334, 0
  %v337 = vxor.u32 %v331, 2147483648
  %v338 = vsel %vm336, %v323, %v337
  %vm339 = vcmp.eq.s32.totalorder %v334, 2
  %v340 = vxor.u32 %v323, 2147483648
  %v341 = vsel %vm339, %v340, %v331
  %v342 = vsel %vm335, %v338, %v341
  %v343 = vsel %vm332, nan, %v342
  %vm344 = vcmp.gt.f32.partialorder %v23, 0.0
  %v345 = vmul.f32 %v17, %v188
  %v346 = vmul.f32 %v15, %v343
  %v347 = vadd.f32 %v345, %v346
  %v348 = vmul.f32 %v347, %v34
  %v349 = vsel %vm344, %v348, %v188
  %v350 = vsub.f32 1.0, %v349
  %s351 = scalar_lea.vmem %s2, 8
  %352 = vst [vmem:[%s351] sm:$0xff] %v350
  %v353 = vmax.f32 %v13, 0.0
  %v354 = vmul.f32 %v13, %v18
  %v355 = vsub.f32 %v353, %v354
  %v356 = vand.u32 2147483647, %v13
  %v357 = vsub.f32 0.0, %v356
  %v358 = vmul.f32 %v357, 1.442695
  %v359 = vpow.pop %v358
  %v360 = vadd.f32 %v359, 1.0
  %v361 = vlog2.pop %v360
  %v362 = vmul.f32 %v361, 0.6931472
  %v363 = vmul.f32 -0.5, %v359
  %v364 = vadd.f32 %v363, 1.0
  %v365 = vmul.f32 %v364, %v359
  %v366 = vand.u32 2147483647, %v359
  %vm367 = vcmp.lt.f32.partialorder %v366, 0.0004427343
  %v368 = vsel %vm367, %v365, %v362
  %v369 = vadd.f32 %v355, %v368
  %370 = vst [vmem:[%s2] sm:$0xff] %v369
  %v371 = vmul.f32 %v23, %v34
  %v372 = vsub.f32 %v371, 1.0
  %v373 = vmul.f32 %v372, %v372
  %s374 = smul.u32 0, 1024
  %v375 = vlaneseq
  %v376 = vshrl.u32 %v375, 7
  %v377 = vlaneseq
  %v378 = vand.u32 %v377, 127
  %v379 = vmul.u32 %v376, 128
  %v380 = vstv %s374
  %v381 = vadd.s32 %v380, %v379
  %v382 = vadd.s32 %v381, %v378
  %vm383 = vcmp.lt.s32.totalorder %v382, 8
  %v384 = vsel %vm383, %v373, 0.0
  %v385 = vadd.f32 %v384, 0.0
  %386 = vst [vmem:[%s3] sm:$0xff] %v385
  // Predicated region
  $region10: #{angle_loss.1} parent=0 // pred_check
    _
  $region11: #{angle_loss.1} parent=0 // pred_check_branch
    %388 = sbr.rel (0) target = $region13
  $region12: #{angle_loss.1} parent=0 // pred_region
    _
  $region13: #{angle_loss.1} parent=0 // pred_fallthru
    _
  // Predicated region
  $region14: #{angle_loss.1} parent=0 // pred_check
    _
  $region15: #{angle_loss.1} parent=0 // pred_check_branch
    %390 = sbr.rel (0) target = $region17
  $region16: #{angle_loss.1} parent=0 // pred_region
    _
  $region17: #{angle_loss.1} parent=0 // pred_fallthru
    _
  // Predicated region
  $region18: #{angle_loss.1} parent=0 // pred_check
    _
  $region19: #{angle_loss.1} parent=0 // pred_check_branch
    %392 = sbr.rel (0) target = $region21
  $region20: #{angle_loss.1} parent=0 // pred_region
    _
  $region21: #{angle_loss.1} parent=0 // pred_fallthru
    _
  // Predicated region
  $region22: #{angle_loss.1} parent=0 // pred_check
    _
  $region23: #{angle_loss.1} parent=0 // pred_check_branch
    %394 = sbr.rel (0) target = $region25
  $region24: #{angle_loss.1} parent=0 // pred_region
    _
  $region25: #{angle_loss.1} parent=0 // pred_fallthru
    _

</llo_original>
